<compile_context>
chip_gen: v7x
topology: tpu7x:2x2x1
jax: 0.10.0
libtpu: 0.0.40
codegen_flags: <defaults>
</compile_context>

<pallas_src>
import math
import numpy as np
import jax
import jax.numpy as jnp
from jax.experimental import pallas as pl
from jax.experimental.pallas import tpu as pltpu

LANE = 128


def build_mask(in_features: int, out_features: int, size_kernel=(3, 3),
               diagonal_zeros: bool = False) -> np.ndarray:
    """Replicates MaskedConv2d.build_mask exactly. Shape (Cout, Cin, KH, KW)."""
    n_in, n_out = in_features, out_features
    assert n_out % n_in == 0 or n_in % n_out == 0, '%d - %d' % (n_in, n_out)
    l = (size_kernel[0] - 1) // 2
    m = (size_kernel[1] - 1) // 2
    mask = np.ones((n_out, n_in, size_kernel[0], size_kernel[1]), dtype=np.float32)
    mask[:, :, :l, :] = 0
    mask[:, :, l, :m] = 0
    if n_out >= n_in:
        k = n_out // n_in
        for i in range(n_in):
            mask[i * k:(i + 1) * k, i + 1:, l, m] = 0
            if diagonal_zeros:
                mask[i * k:(i + 1) * k, i:i + 1, l, m] = 0
    else:
        k = n_in // n_out
        for i in range(n_out):
            mask[i:i + 1, (i + 1) * k:, l, m] = 0
            if diagonal_zeros:
                mask[i:i + 1, i * k:(i + 1) * k, l, m] = 0
    return mask


def masked_conv2d_kernel(xs_ref, w_ref, o_ref):
    """One (image, HW-tile) per grid step.

    xs_ref : (1, TILE_HW, K_p)   -- im2col patches; col K holds 1.0 (bias column)
    w_ref  : (K_p, Cout_p)       -- mask folded in; row K holds the bias vector
    o_ref  : (1, TILE_HW, Cout_p)

    Single full-contraction MXU matmul, f32 accumulation; bias comes out of the
    matmul for free.
    """
    o_ref[0] = jnp.dot(xs_ref[0], w_ref[...],
                       preferred_element_type=jnp.float32).astype(o_ref.dtype)


def _pick_tile_hw(hw: int, n: int) -> int:
    """HW tile: multiple of 8 (f32 sublanes), <=512 rows, and small enough to
    give >=4 parallel grid steps (feeds both v7x TCs + double buffering)."""
    t = min(512, ((hw + 7) // 8) * 8)
    while t > 128 and n * ((hw + t - 1) // t) < 4:
        t //= 2
    return max(t, 8)


def masked_conv2d(x, weight, mask, bias, padding=(1, 1),
                  compute_dtype=jnp.float32):
    """x: (N, Cin, H, W); weight/mask: (Cout, Cin, KH, KW); bias: (Cout,)."""
    N, Cin, H, W = x.shape
    Cout, _, KH, KW = weight.shape
    ph, pw = padding
    Hout = H + 2 * ph - (KH - 1)
    Wout = W + 2 * pw - (KW - 1)
    HW = Hout * Wout

    K = KH * KW * Cin                                   # true im2col contraction
    K_p = max(LANE, ((K + 1 + LANE - 1) // LANE) * LANE)  # +1 bias column, lane pad
    Cout_p = ((Cout + LANE - 1) // LANE) * LANE          # lane-dense output channels

    # --- weights: fold mask, im2col layout, bias row, pad to (K_p, Cout_p) ---
    w_masked = (mask * weight).astype(compute_dtype)            # (Cout, Cin, KH, KW)
    w_rows = jnp.transpose(w_masked, (2, 3, 1, 0)).reshape(K, Cout)   # (kh,kw,cin) rows
    w_full = jnp.concatenate(
        [w_rows,
         bias.reshape(1, Cout).astype(compute_dtype),           # bias row (col K of xs)
         jnp.zeros((K_p - K - 1, Cout), compute_dtype)], axis=0)
    w_full = jnp.pad(w_full, ((0, 0), (0, Cout_p - Cout)))      # (K_p, Cout_p)

    # --- im2col patches with a ones column (bias) and zero K-padding ----------
    x_nhwc = jnp.transpose(x, (0, 2, 3, 1)).astype(compute_dtype)
    x_pad = jnp.pad(x_nhwc, ((0, 0), (ph, ph), (pw, pw), (0, 0)))
    views = [x_pad[:, kh:kh + Hout, kw:kw + Wout, :]            # (N, Hout, Wout, Cin)
             for kh in range(KH) for kw in range(KW)]
    ones = jnp.ones((N, Hout, Wout, 1), compute_dtype)
    zpad = jnp.zeros((N, Hout, Wout, K_p - K - 1), compute_dtype)
    xs = jnp.concatenate(views + [ones, zpad], axis=-1).reshape(N, HW, K_p)

    # --- HW tiling: second parallel grid axis ---------------------------------
    TILE = _pick_tile_hw(HW, N)
    n_tiles = pl.cdiv(HW, TILE)
    HW_p = n_tiles * TILE
    if HW_p != HW:
        xs = jnp.pad(xs, ((0, 0), (0, HW_p - HW), (0, 0)))

    # cost estimate with TRUE (unpadded) sizes -- advisory for XLA scheduling.
    flops = 2 * N * HW * (K + 1) * Cout
    itemsize = jnp.dtype(compute_dtype).itemsize
    bytes_accessed = (itemsize * (N * HW * K + K * Cout + Cout)
                      + 4 * N * HW * Cout)

    out = pl.pallas_call(
        masked_conv2d_kernel,
        out_shape=jax.ShapeDtypeStruct((N, HW_p, Cout_p), jnp.float32),
        grid_spec=pltpu.PrefetchScalarGridSpec(
            num_scalar_prefetch=0,
            grid=(N, n_tiles),
            in_specs=[
                pl.BlockSpec((1, TILE, K_p), lambda n, t: (n, t, 0)),
                pl.BlockSpec((K_p, Cout_p), lambda n, t: (0, 0)),
            ],
            out_specs=pl.BlockSpec((1, TILE, Cout_p), lambda n, t: (n, t, 0)),
        ),
        compiler_params=pltpu.CompilerParams(
            dimension_semantics=("parallel", "parallel")),
        cost_estimate=pl.CostEstimate(flops=flops, transcendentals=0,
                                      bytes_accessed=bytes_accessed),
    )(xs, w_full)

    # (N, HW_p, Cout_p) -> (N, Cout, Hout, Wout)
    out = out[:, :HW, :Cout].reshape(N, Hout, Wout, Cout)
    return jnp.transpose(out, (0, 3, 1, 2))


if __name__ == "__main__":
    # Module config: in_features=4, out_features=8, size_kernel=(3,3),
    # diagonal_zeros=False, bias=True.  Input (N, Cin, H, W) = (2, 4, 16, 16).
    in_features, out_features = 4, 8
    size_kernel = (3, 3)
    diagonal_zeros = False
    N, H, W = 2, 16, 16

    key = jax.random.PRNGKey(0)
    kx, kw = jax.random.split(key)

    # Deterministic params: kaiming-normal-ish weight (fan_in = Cin*KH*KW),
    # zero bias, exactly like reset_parameters().
    fan_in = in_features * size_kernel[0] * size_kernel[1]
    weight = (jax.random.normal(
        kw, (out_features, in_features, *size_kernel), dtype=jnp.float32)
        * jnp.sqrt(2.0 / fan_in))
    bias = jnp.zeros((out_features,), dtype=jnp.float32)
    mask = jnp.asarray(build_mask(in_features, out_features, size_kernel,
                                  diagonal_zeros))

    x = jax.random.normal(kx, (N, in_features, H, W), dtype=jnp.float32)

    # f32 path (exact vs. reference).  On v6e/v7x, pass
    # compute_dtype=jnp.bfloat16 for the bf16-native MXU rate (loosen rtol).
    out = masked_conv2d(x, weight, mask, bias, padding=(1, 1))
    out = jax.block_until_ready(out)

    # Reference check (plain JAX conv): F.conv2d(x, mask*weight, bias, padding=1)
    ref = jax.lax.conv_general_dilated(
        x, mask * weight, window_strides=(1, 1), padding=((1, 1), (1, 1)),
        dimension_numbers=('NCHW', 'OIHW', 'NCHW')) + bias[None, :, None, None]
    np.testing.assert_allclose(np.asarray(out), np.asarray(ref),
                               rtol=1e-5, atol=1e-5)

    print("KERNEL_OK")
</pallas_src>

<mosaic_0001>
module attributes {stable_mosaic.version = 11 : i64} {
  func.func @masked_conv2d_kernel(%arg0: i32, %arg1: i32, %arg2: memref<1x128x128xf32, #tpu.memory_space<vmem>>, %arg3: memref<128x128xf32, #tpu.memory_space<vmem>>, %arg4: memref<1x128x128xf32, #tpu.memory_space<vmem>>) attributes {dimension_semantics = [#tpu.dimension_semantics<parallel>, #tpu.dimension_semantics<parallel>], iteration_bounds = array<i64: 2, 2>, scalar_prefetch = 0 : i64, scratch_operands = 0 : i64, tpu.core_type = #tpu.core_type<tc>, window_params = [{transform_indices = @transform_0, window_bounds = array<i64: 1, 128, 128>}, {pipeline_mode = #tpu.pipeline_mode<synchronous>, transform_indices = @transform_1, window_bounds = array<i64: 128, 128>}, {transform_indices = @transform_2, window_bounds = array<i64: 1, 128, 128>}]} {
    %c0 = arith.constant 0 : index
    %c0_0 = arith.constant 0 : index
    %c0_1 = arith.constant 0 : index
    %0 = vector.load %arg2[%c0, %c0_0, %c0_1] : memref<1x128x128xf32, #tpu.memory_space<vmem>>, vector<1x128x128xf32>
    %1 = vector.shape_cast %0 : vector<1x128x128xf32> to vector<128x128xf32>
    %c0_2 = arith.constant 0 : index
    %c0_3 = arith.constant 0 : index
    %2 = vector.load %arg3[%c0_2, %c0_3] : memref<128x128xf32, #tpu.memory_space<vmem>>, vector<128x128xf32>
    %cst = arith.constant dense<0.000000e+00> : vector<128x128xf32>
    %3 = tpu.matmul %1, %2, %cst {dimension_numbers = #tpu.dot_dimension_numbers<[1], [0], [0], [1], [0, 0, 1, 1], [], []>} : vector<128x128xf32>, vector<128x128xf32>, vector<128x128xf32> -> vector<128x128xf32>
    %c0_4 = arith.constant 0 : index
    %c0_5 = arith.constant 0 : index
    %c0_6 = arith.constant 0 : index
    %4 = vector.load %arg4[%c0_4, %c0_5, %c0_6] : memref<1x128x128xf32, #tpu.memory_space<vmem>>, vector<1x128x128xf32>
    %5 = vector.shape_cast %4 : vector<1x128x128xf32> to vector<128x128xf32>
    %6 = vector.shape_cast %3 : vector<128x128xf32> to vector<1x128x128xf32>
    tpu.vector_store %arg4[%c0_4, %c0_5, %c0_6], %6 {strides = array<i32>} : memref<1x128x128xf32, #tpu.memory_space<vmem>>, vector<1x128x128xf32>,
    return
  }
  func.func @transform_0(%arg0: i32, %arg1: i32) -> (i32, i32, i32) {
    %c0_i32 = arith.constant 0 : i32
    %c0_i32_0 = arith.constant 0 : i32
    return %arg0, %arg1, %c0_i32 : i32, i32, i32
  }
  func.func @transform_1(%arg0: i32, %arg1: i32) -> (i32, i32) {
    %c0_i32 = arith.constant 0 : i32
    %c0_i32_0 = arith.constant 0 : i32
    %c0_i32_1 = arith.constant 0 : i32
    return %c0_i32, %c0_i32_0 : i32, i32
  }
  func.func @transform_2(%arg0: i32, %arg1: i32) -> (i32, i32, i32) {
    %c0_i32 = arith.constant 0 : i32
    %c0_i32_0 = arith.constant 0 : i32
    return %arg0, %arg1, %c0_i32 : i32, i32, i32
  }
}

</mosaic_0001>

<llo_original>
// kernel: tpu_custom_call.1
$region0: #{tpu_custom_call.1}
  #allocation0 [shape = 'u32[]', space=smem, size = 0x4, offset = 0x4, fixed_abs, tag = 'smem constant byte address 0x4 - core index']
  #allocation1 [shape = 'u32[144,128]{1,0:T(1,128)}', space=vmem, size = 0x12000, scoped, tag = 'internal scratch']
  %s0 = inlined_call_operand.hbm [shape: f32[2,256,128], index: 0, kind: input, shape index: {}]
  %s1 = inlined_call_operand.hbm [shape: f32[128,128], index: 1, kind: input, shape index: {}]
  %s2 = inlined_call_operand.hbm [shape: f32[2,256,128], index: 2, kind: output, shape index: {}]
  %s3 = sld [smem:[#allocation0]]
  $region49: #{tpu_custom_call.1} parent=0
    _
  %s5 = ssub.s32 1, %s3
  %s6 = scalar_select 0, %s5, %s3
  $region1: #{tpu_custom_call.1} parent=0
    #allocation2 [shape = 'u8[131072]{0}', space=vmem, size = 0x20000, scoped, tag = 'input window, operand 0']
    #allocation3 [shape = 's32[2]{0}', space=sflag, size = 0x8, scoped, tag = 'scoped memory for tpu_custom_call.1']
    #allocation4 [shape = 's32[2]{0}', space=sflag, size = 0x8, scoped, tag = 'scoped memory for tpu_custom_call.1']
    #allocation5 [shape = 'u8[65536]{0}', space=vmem, size = 0x10000, scoped, tag = 'input window, operand 1, single buffered']
    #allocation6 [shape = 's32[1]{0}', space=sflag, size = 0x4, scoped, tag = 'scoped memory for tpu_custom_call.1']
    #allocation7 [shape = 'u8[131072]{0}', space=vmem, size = 0x20000, scoped, tag = 'output window, operand 0']
    %7 = vsyncpa [#allocation3], 0
    %s8 = scalar_lea.sflag [#allocation3], 1
    %9 = vsyncpa %s8, 0
    %10 = vsyncpa [#allocation6], 0
    %11 = vsyncpa [#allocation4], 0
    %s12 = scalar_lea.sflag [#allocation4], 1
    %13 = vsyncpa %s12, 0
    loop: start=0, step=1, limit=6
    $region2: #{tpu_custom_call.1} parent=1 // loop_pre_header
      _
    $region3: #{tpu_custom_call.1} parent=1 // loop_header
      %s15 = sphi 0, %s19
      %p16 = scmp.ge.s32.totalorder %s15, 6
      %s22 = sphi 0, %s34
      %s23 = sphi 0, %s30
      %s24 = sphi 0, %s22
      %s25 = sphi 0, %s23
      %s26 = sphi 0, %s24
      %s27 = sphi 0, %s25
      %s39 = sphi 0, %s41
      %s42 = sphi 0, %s39
      %s43 = sphi 0, %s42
      %s59 = sphi 0, %s43
      %s63 = sphi 0, %s63
      %s65 = sphi 0, %s63
      %s66 = sphi 0, %s65
      %s80 = sphi 0, %s66
      %s88 = sphi 0, %s90
      %s91 = sphi 0, %s88
      %s92 = sphi 0, %s91
      %s108 = sphi 0, %s92
    $region4: #{tpu_custom_call.1} parent=1 // loop_header_branch
      %18 = sbr.rel (%p16) target = $region8
    $region5: #{tpu_custom_call.1} parent=1 // loop_body
      %s20 = ssub.s32 %s15, 1
      %s21 = ssub.s32 %s15, 2
      %s28 = sadd.s32 1, %s23
      %p29 = scmp.ge.s32.totalorder %s28, 2
      %s30 = scalar_select %p29, 0, %s28
      %s31 = sadd.s32 1, %s22
      %s32 = scalar_select %p29, %s31, %s22
      %p33 = scmp.ge.s32.totalorder %s32, 2
      %s34 = scalar_select %p33, 0, %s32
      %s35 = ssub.s32 %s22, %s34
      %s36 = ssub.s32 %s23, %s30
      %s37 = sor.u32 %s35, %s36
      %p38 = scmp.eq.s32.totalorder %s37, 0
      %s40 = sadd.s32 %s39, 1
      %s41 = scalar_select %p38, %s39, %s40
      %p44 = pneg %p38
      %p45 = scmp.eq.s32.totalorder %s15, 3
      %p46 = por %p44, %p45
      %p47 = scmp.ne.s32.totalorder %s39, %s42
      %p48 = scmp.eq.s32.totalorder %s15, 0
      %p49 = por %p47, %p48
      %p50 = scmp.ne.s32.totalorder %s39, %s42
      %p51 = scmp.eq.s32.totalorder %s20, 3
      %p52 = por %p50, %p51
      %p53 = scmp.ne.s32.totalorder %s42, %s43
      %p54 = scmp.eq.s32.totalorder %s20, 0
      %p55 = por %p53, %p54
      %p56 = scmp.ne.s32.totalorder %s42, %s43
      %p57 = scmp.eq.s32.totalorder %s21, 3
      %p58 = por %p56, %p57
      %p60 = scmp.ne.s32.totalorder %s43, %s59
      %p61 = scmp.eq.s32.totalorder %s21, 0
      %p62 = por %p60, %p61
      %s64 = sadd.s32 %s63, 1
      %p67 = scmp.eq.s32.totalorder %s15, 3
      %p68 = scmp.ne.s32.totalorder %s63, %s65
      %p69 = scmp.eq.s32.totalorder %s15, 0
      %p70 = por %p68, %p69
      %p71 = scmp.ne.s32.totalorder %s63, %s65
      %p72 = scmp.eq.s32.totalorder %s20, 3
      %p73 = por %p71, %p72
      %p74 = scmp.ne.s32.totalorder %s65, %s66
      %p75 = scmp.eq.s32.totalorder %s20, 0
      %p76 = por %p74, %p75
      %p77 = scmp.ne.s32.totalorder %s65, %s66
      %p78 = scmp.eq.s32.totalorder %s21, 3
      %p79 = por %p77, %p78
      %p81 = scmp.ne.s32.totalorder %s66, %s80
      %p82 = scmp.eq.s32.totalorder %s21, 0
      %p83 = por %p81, %p82
      %s84 = ssub.s32 %s22, %s34
      %s85 = ssub.s32 %s23, %s30
      %s86 = sor.u32 %s84, %s85
      %p87 = scmp.eq.s32.totalorder %s86, 0
      %s89 = sadd.s32 %s88, 1
      %s90 = scalar_select %p87, %s88, %s89
      %p93 = pneg %p87
      %p94 = scmp.eq.s32.totalorder %s15, 3
      %p95 = por %p93, %p94
      %p96 = scmp.ne.s32.totalorder %s88, %s91
      %p97 = scmp.eq.s32.totalorder %s15, 0
      %p98 = por %p96, %p97
      %p99 = scmp.ne.s32.totalorder %s88, %s91
      %p100 = scmp.eq.s32.totalorder %s20, 3
      %p101 = por %p99, %p100
      %p102 = scmp.ne.s32.totalorder %s91, %s92
      %p103 = scmp.eq.s32.totalorder %s20, 0
      %p104 = por %p102, %p103
      %p105 = scmp.ne.s32.totalorder %s91, %s92
      %p106 = scmp.eq.s32.totalorder %s21, 3
      %p107 = por %p105, %p106
      %p109 = scmp.ne.s32.totalorder %s92, %s108
      %p110 = scmp.eq.s32.totalorder %s21, 0
      %p111 = por %p109, %p110
      %p112 = scmp.le.s32.totalorder 1, %s15
      %p113 = scmp.lt.s32.totalorder %s15, 5
      %p114 = pnand %p112, %p113
      %p115 = pneg %p114
      // Predicated region
      $region9: #{tpu_custom_call.1} parent=5 // pred_check
        _
      $region10: #{tpu_custom_call.1} parent=5 // pred_check_branch
        %117 = sbr.rel (%p114) target = $region12
      $region11: #{tpu_custom_call.1} parent=5 // pred_region
        %s118 = ssub.s32 %s15, 1
        // Predicated region
        $region13: #{tpu_custom_call.1} parent=11 // pred_check
          %p119 = pneg %p76
        $region14: #{tpu_custom_call.1} parent=11 // pred_check_branch
          %121 = sbr.rel (%p119) target = $region16
        $region15: #{tpu_custom_call.1} parent=11 // pred_region
          %s123 = ssub.s32 2048, 2048
          %124 = vsyncadd [#allocation6], %s123
          %s125 = sshll.u32 [#allocation5], 4
          %s126 = int_to_ptr.vmem [resolvable:$true] %s125
          %131 = dma.hbm_to_vmem [thread:$0]  %s1, 2048, %s126, [#allocation6], 128, 128, 8
        $region16: #{tpu_custom_call.1} parent=11 // pred_fallthru
          _
      $region12: #{tpu_custom_call.1} parent=5 // pred_fallthru
        _
      %p132 = scmp.lt.s32.totalorder %s15, 4
      // Predicated region
      $region17: #{tpu_custom_call.1} parent=5 // pred_check
        %p133 = pneg %p132
      $region18: #{tpu_custom_call.1} parent=5 // pred_check_branch
        %135 = sbr.rel (%p133) target = $region20
      $region19: #{tpu_custom_call.1} parent=5 // pred_region
        // Predicated region
        $region21: #{tpu_custom_call.1} parent=19 // pred_check
          %p136 = pneg %p49
        $region22: #{tpu_custom_call.1} parent=19 // pred_check_branch
          %138 = sbr.rel (%p136) target = $region24
        $region23: #{tpu_custom_call.1} parent=19 // pred_region
          %s139 = sand.u32 %s39, 1
          %s140 = scalar_lea.sflag [#allocation3], %s139
          %s141 = sand.u32 %s39, 1
          %s142 = smul.addr %s141, 128
          %s143 = scalar_lea.vmem [#allocation2], %s142
          %s144 = smul.u32 16, %s23
          %s146 = ssub.s32 2048, 2048
          %147 = vsyncadd %s140, %s146
          %s148 = smul.addr %s22, 32
          %s149 = sadd.s32 %s144, %s148
          %s150 = smul.addr %s149, 128
          %s151 = scalar_lea.hbm %s0, %s150
          %s152 = sshll.u32 %s143, 4
          %s153 = int_to_ptr.vmem [resolvable:$true] %s152
          %158 = dma.hbm_to_vmem [thread:$0]  %s151, 2048, %s153, %s140, 128, 128, 8
        $region24: #{tpu_custom_call.1} parent=19 // pred_fallthru
          _
      $region20: #{tpu_custom_call.1} parent=5 // pred_fallthru
        _
      %p159 = scmp.le.s32.totalorder 1, %s15
      %p160 = scmp.lt.s32.totalorder %s15, 5
      %p161 = pnand %p159, %p160
      %p162 = pneg %p161
      // Predicated region
      $region25: #{tpu_custom_call.1} parent=5 // pred_check
        _
      $region26: #{tpu_custom_call.1} parent=5 // pred_check_branch
        %164 = sbr.rel (%p161) target = $region28
      $region27: #{tpu_custom_call.1} parent=5 // pred_region
        %s165 = ssub.s32 %s15, 1
        %s166 = sand.u32 %s42, 1
        %s167 = scalar_lea.sflag [#allocation3], %s166
        %s168 = sand.u32 %s42, 1
        %s169 = smul.addr %s168, 128
        %s170 = scalar_lea.vmem [#allocation2], %s169
        // Predicated region
        $region29: #{tpu_custom_call.1} parent=27 // pred_check
          %p171 = pneg %p55
        $region30: #{tpu_custom_call.1} parent=27 // pred_check_branch
          %173 = sbr.rel (%p171) target = $region32
        $region31: #{tpu_custom_call.1} parent=27 // pred_region
          %174 = dma.done %s167, 2048
        $region32: #{tpu_custom_call.1} parent=27 // pred_fallthru
          _
        // Predicated region
        $region33: #{tpu_custom_call.1} parent=27 // pred_check
          %p175 = pneg %p76
        $region34: #{tpu_custom_call.1} parent=27 // pred_check_branch
          %177 = sbr.rel (%p175) target = $region36
        $region35: #{tpu_custom_call.1} parent=27 // pred_region
          %178 = dma.done [#allocation6], 2048
        $region36: #{tpu_custom_call.1} parent=27 // pred_fallthru
          _
        %s179 = sand.u32 %s42, 1
        %s180 = scalar_lea.sflag [#allocation3], %s179
        %s181 = sand.u32 %s42, 1
        %s182 = smul.addr %s181, 128
        %s183 = scalar_lea.vmem [#allocation2], %s182
        %p184 = pneg %p55
        %p185 = pneg %p52
        %p186 = pneg %p76
        %p187 = pneg %p73
        %p188 = pneg %p104
        %p189 = pneg %p101
        %s190 = sand.u32 %s91, 1
        %s191 = scalar_lea.sflag [#allocation4], %s190
        %s192 = sand.u32 %s91, 1
        %s193 = smul.addr %s192, 128
        %s194 = scalar_lea.vmem [#allocation7], %s193
        %s195 = smul.u32 16, %s25
        %s196 = smul.u32 16, %s25
        %v197 = vld [vmem:[%s170] sm:$0xff]
        %v198 = vld [vmem:[%s170 + $0x8] sm:$0xff]
        %v199 = vld [vmem:[%s170 + $0x10] sm:$0xff]
        %v200 = vld [vmem:[%s170 + $0x18] sm:$0xff]
        %v201 = vld [vmem:[%s170 + $0x20] sm:$0xff]
        %v202 = vld [vmem:[%s170 + $0x28] sm:$0xff]
        %v203 = vld [vmem:[%s170 + $0x30] sm:$0xff]
        %v204 = vld [vmem:[%s170 + $0x38] sm:$0xff]
        %v205 = vld [vmem:[%s170 + $0x40] sm:$0xff]
        %v206 = vld [vmem:[%s170 + $0x48] sm:$0xff]
        %v207 = vld [vmem:[%s170 + $0x50] sm:$0xff]
        %v208 = vld [vmem:[%s170 + $0x58] sm:$0xff]
        %v209 = vld [vmem:[%s170 + $0x60] sm:$0xff]
        %v210 = vld [vmem:[%s170 + $0x68] sm:$0xff]
        %v211 = vld [vmem:[%s170 + $0x70] sm:$0xff]
        %v212 = vld [vmem:[%s170 + $0x78] sm:$0xff]
        %v213 = vld [vmem:[#allocation5] sm:$0xff]
        %v214 = vld [vmem:[#allocation5 + $0x8] sm:$0xff]
        %v215 = vld [vmem:[#allocation5 + $0x10] sm:$0xff]
        %v216 = vld [vmem:[#allocation5 + $0x18] sm:$0xff]
        %v217 = vld [vmem:[#allocation5 + $0x20] sm:$0xff]
        %v218 = vld [vmem:[#allocation5 + $0x28] sm:$0xff]
        %v219 = vld [vmem:[#allocation5 + $0x30] sm:$0xff]
        %v220 = vld [vmem:[#allocation5 + $0x38] sm:$0xff]
        %v221 = vld [vmem:[#allocation5 + $0x40] sm:$0xff]
        %v222 = vld [vmem:[#allocation5 + $0x48] sm:$0xff]
        %v223 = vld [vmem:[#allocation5 + $0x50] sm:$0xff]
        %v224 = vld [vmem:[#allocation5 + $0x58] sm:$0xff]
        %v225 = vld [vmem:[#allocation5 + $0x60] sm:$0xff]
        %v226 = vld [vmem:[#allocation5 + $0x68] sm:$0xff]
        %v227 = vld [vmem:[#allocation5 + $0x70] sm:$0xff]
        %v228 = vld [vmem:[#allocation5 + $0x78] sm:$0xff]
        %229 = vmatprep.subr.mxu0 0.0
        %230 = vmatpush1.msra.mxu0 %v213
        %231 = vmatprep.subr.mxu0 0.0
        %232 = vmatpush1.msra.mxu0 %v214
        %233 = vmatprep.subr.mxu0 0.0
        %234 = vmatpush1.msra.mxu0 %v215
        %235 = vmatprep.subr.mxu0 0.0
        %236 = vmatpush1.msra.mxu0 %v216
        %237 = vmatprep.subr.mxu0 0.0
        %238 = vmatpush1.msra.mxu0 %v217
        %239 = vmatprep.subr.mxu0 0.0
        %240 = vmatpush1.msra.mxu0 %v218
        %241 = vmatprep.subr.mxu0 0.0
        %242 = vmatpush1.msra.mxu0 %v219
        %243 = vmatprep.subr.mxu0 0.0
        %244 = vmatpush1.msra.mxu0 %v220
        %245 = vmatprep.subr.mxu0 0.0
        %246 = vmatpush1.msra.mxu0 %v221
        %247 = vmatprep.subr.mxu0 0.0
        %248 = vmatpush1.msra.mxu0 %v222
        %249 = vmatprep.subr.mxu0 0.0
        %250 = vmatpush1.msra.mxu0 %v223
        %251 = vmatprep.subr.mxu0 0.0
        %252 = vmatpush1.msra.mxu0 %v224
        %253 = vmatprep.subr.mxu0 0.0
        %254 = vmatpush1.msra.mxu0 %v225
        %255 = vmatprep.subr.mxu0 0.0
        %256 = vmatpush1.msra.mxu0 %v226
        %257 = vmatprep.subr.mxu0 0.0
        %258 = vmatpush1.msra.mxu0 %v227
        %259 = vmatprep.subr.mxu0 0.0
        %260 = vmatpush1.msra.mxu0 %v228
        %261 = vmatprep.subr.mxu0 0.0
        %262 = vmatpush1.msra.mxu0 0.0
        %263 = vmatprep.subr.mxu0 0.0
        %264 = vmatpush1.msra.mxu0 0.0
        %265 = vmatprep.subr.mxu0 0.0
        %266 = vmatpush1.msra.mxu0 0.0
        %267 = vmatprep.subr.mxu0 0.0
        %268 = vmatpush1.msra.mxu0 0.0
        %269 = vmatprep.subr.mxu0 0.0
        %270 = vmatpush1.msra.mxu0 0.0
        %271 = vmatprep.subr.mxu0 0.0
        %272 = vmatpush1.msra.mxu0 0.0
        %273 = vmatprep.subr.mxu0 0.0
        %274 = vmatpush1.msra.mxu0 0.0
        %275 = vmatprep.subr.mxu0 0.0
        %276 = vmatpush1.msra.mxu0 0.0
        %277 = vmatprep.subr.mxu0 0.0
        %278 = vmatpush1.msra.mxu0 0.0
        %279 = vmatprep.subr.mxu0 0.0
        %280 = vmatpush1.msra.mxu0 0.0
        %281 = vmatprep.subr.mxu0 0.0
        %282 = vmatpush1.msra.mxu0 0.0
        %283 = vmatprep.subr.mxu0 0.0
        %284 = vmatpush1.msra.mxu0 0.0
        %285 = vmatprep.subr.mxu0 0.0
        %286 = vmatpush1.msra.mxu0 0.0
        %287 = vmatprep.subr.mxu0 0.0
        %288 = vmatpush1.msra.mxu0 0.0
        %289 = vmatprep.subr.mxu0 0.0
        %290 = vmatpush1.msra.mxu0 0.0
        %291 = vmatprep.subr.mxu0 0.0
        %292 = vmatpush1.msra.mxu0 0.0
        %293 = vmatprep.mubr.f32.mxu0 0.0
        %294 = vmatmul.mubr.f32.gmra.mrb[0].mxu0 %v197
        %v295 = vpop.f32.mrb[0].mxu0
        %v296 = vadd.f32 0.0, %v295
        %v297 = vpop.f32.mrb[0].mxu0
        %298 = vmatprep.mubr.f32.mxu0 0.0
        %299 = vmatmul.mubr.f32.gmra.mrb[0].mxu0 %v198
        %v300 = vpop.f32.mrb[0].mxu0
        %v301 = vadd.f32 0.0, %v300
        %v302 = vpop.f32.mrb[0].mxu0
        %303 = vmatprep.mubr.f32.mxu0 0.0
        %304 = vmatmul.mubr.f32.gmra.mrb[0].mxu0 %v199
        %v305 = vpop.f32.mrb[0].mxu0
        %v306 = vadd.f32 0.0, %v305
        %v307 = vpop.f32.mrb[0].mxu0
        %308 = vmatprep.mubr.f32.mxu0 0.0
        %309 = vmatmul.mubr.f32.gmra.mrb[0].mxu0 %v200
        %v310 = vpop.f32.mrb[0].mxu0
        %v311 = vadd.f32 0.0, %v310
        %v312 = vpop.f32.mrb[0].mxu0
        %313 = vmatprep.mubr.f32.mxu0 0.0
        %314 = vmatmul.mubr.f32.gmra.mrb[0].mxu0 %v201
        %v315 = vpop.f32.mrb[0].mxu0
        %v316 = vadd.f32 0.0, %v315
        %v317 = vpop.f32.mrb[0].mxu0
        %318 = vmatprep.mubr.f32.mxu0 0.0
        %319 = vmatmul.mubr.f32.gmra.mrb[0].mxu0 %v202
        %v320 = vpop.f32.mrb[0].mxu0
        %v321 = vadd.f32 0.0, %v320
        %v322 = vpop.f32.mrb[0].mxu0
        %323 = vmatprep.mubr.f32.mxu0 0.0
        %324 = vmatmul.mubr.f32.gmra.mrb[0].mxu0 %v203
        %v325 = vpop.f32.mrb[0].mxu0
        %v326 = vadd.f32 0.0, %v325
        %v327 = vpop.f32.mrb[0].mxu0
        %328 = vmatprep.mubr.f32.mxu0 0.0
        %329 = vmatmul.mubr.f32.gmra.mrb[0].mxu0 %v204
        %v330 = vpop.f32.mrb[0].mxu0
        %v331 = vadd.f32 0.0, %v330
        %v332 = vpop.f32.mrb[0].mxu0
        %333 = vmatprep.mubr.f32.mxu0 0.0
        %334 = vmatmul.mubr.f32.gmra.mrb[0].mxu0 %v205
        %v335 = vpop.f32.mrb[0].mxu0
        %v336 = vadd.f32 0.0, %v335
        %v337 = vpop.f32.mrb[0].mxu0
        %338 = vmatprep.mubr.f32.mxu0 0.0
        %339 = vmatmul.mubr.f32.gmra.mrb[0].mxu0 %v206
        %v340 = vpop.f32.mrb[0].mxu0
        %v341 = vadd.f32 0.0, %v340
        %v342 = vpop.f32.mrb[0].mxu0
        %343 = vmatprep.mubr.f32.mxu0 0.0
        %344 = vmatmul.mubr.f32.gmra.mrb[0].mxu0 %v207
        %v345 = vpop.f32.mrb[0].mxu0
        %v346 = vadd.f32 0.0, %v345
        %v347 = vpop.f32.mrb[0].mxu0
        %348 = vmatprep.mubr.f32.mxu0 0.0
        %349 = vmatmul.mubr.f32.gmra.mrb[0].mxu0 %v208
        %v350 = vpop.f32.mrb[0].mxu0
        %v351 = vadd.f32 0.0, %v350
        %v352 = vpop.f32.mrb[0].mxu0
        %353 = vmatprep.mubr.f32.mxu0 0.0
        %354 = vmatmul.mubr.f32.gmra.mrb[0].mxu0 %v209
        %v355 = vpop.f32.mrb[0].mxu0
        %v356 = vadd.f32 0.0, %v355
        %v357 = vpop.f32.mrb[0].mxu0
        %358 = vmatprep.mubr.f32.mxu0 0.0
        %359 = vmatmul.mubr.f32.gmra.mrb[0].mxu0 %v210
        %v360 = vpop.f32.mrb[0].mxu0
        %v361 = vadd.f32 0.0, %v360
        %v362 = vpop.f32.mrb[0].mxu0
        %363 = vmatprep.mubr.f32.mxu0 0.0
        %364 = vmatmul.mubr.f32.gmra.mrb[0].mxu0 %v211
        %v365 = vpop.f32.mrb[0].mxu0
        %v366 = vadd.f32 0.0, %v365
        %v367 = vpop.f32.mrb[0].mxu0
        %368 = vmatprep.mubr.f32.mxu0 0.0
        %369 = vmatmul.mubr.f32.gmra.mrb[0].mxu0 %v212
        %v370 = vpop.f32.mrb[0].mxu0
        %v371 = vadd.f32 0.0, %v370
        %v372 = vpop.f32.mrb[0].mxu0
        %373 = vdwg.mxu0
        %374 = vst [vmem:[%s194] sm:$0xff] %v296
        %375 = vst [vmem:[%s194 + $0x8] sm:$0xff] %v301
        %376 = vst [vmem:[%s194 + $0x10] sm:$0xff] %v306
        %377 = vst [vmem:[%s194 + $0x18] sm:$0xff] %v311
        %378 = vst [vmem:[%s194 + $0x20] sm:$0xff] %v316
        %379 = vst [vmem:[%s194 + $0x28] sm:$0xff] %v321
        %380 = vst [vmem:[%s194 + $0x30] sm:$0xff] %v326
        %381 = vst [vmem:[%s194 + $0x38] sm:$0xff] %v331
        %382 = vst [vmem:[%s194 + $0x40] sm:$0xff] %v336
        %383 = vst [vmem:[%s194 + $0x48] sm:$0xff] %v341
        %384 = vst [vmem:[%s194 + $0x50] sm:$0xff] %v346
        %385 = vst [vmem:[%s194 + $0x58] sm:$0xff] %v351
        %386 = vst [vmem:[%s194 + $0x60] sm:$0xff] %v356
        %387 = vst [vmem:[%s194 + $0x68] sm:$0xff] %v361
        %388 = vst [vmem:[%s194 + $0x70] sm:$0xff] %v366
        %389 = vst [vmem:[%s194 + $0x78] sm:$0xff] %v371
        %s390 = sand.u32 %s91, 1
        %s391 = scalar_lea.sflag [#allocation4], %s390
        %s392 = sand.u32 %s91, 1
        %s393 = smul.addr %s392, 128
        %s394 = scalar_lea.vmem [#allocation7], %s393
        // Predicated region
        $region37: #{tpu_custom_call.1} parent=27 // pred_check
          %p395 = pneg %p101
        $region38: #{tpu_custom_call.1} parent=27 // pred_check_branch
          %397 = sbr.rel (%p395) target = $region40
        $region39: #{tpu_custom_call.1} parent=27 // pred_region
          %s398 = smul.u32 16, %s25
          %s400 = ssub.s32 2048, 2048
          %401 = vsyncadd %s391, %s400
          %s402 = smul.addr %s24, 32
          %s403 = sadd.s32 %s398, %s402
          %s404 = smul.addr %s403, 128
          %s405 = scalar_lea.hbm %s2, %s404
          %s406 = sshll.u32 %s394, 4
          %s407 = int_to_ptr.vmem [resolvable:$true] %s406
          %412 = dma.vmem_to_hbm [thread:$0]  %s407, 2048, %s405, %s391, 128, 128, 8
        $region40: #{tpu_custom_call.1} parent=27 // pred_fallthru
          _
      $region28: #{tpu_custom_call.1} parent=5 // pred_fallthru
        _
      %p413 = scmp.le.s32.totalorder 2, %s15
      // Predicated region
      $region41: #{tpu_custom_call.1} parent=5 // pred_check
        %p414 = pneg %p413
      $region42: #{tpu_custom_call.1} parent=5 // pred_check_branch
        %416 = sbr.rel (%p414) target = $region44
      $region43: #{tpu_custom_call.1} parent=5 // pred_region
        %s417 = ssub.s32 %s15, 2
        // Predicated region
        $region45: #{tpu_custom_call.1} parent=43 // pred_check
          %p418 = pneg %p107
        $region46: #{tpu_custom_call.1} parent=43 // pred_check_branch
          %420 = sbr.rel (%p418) target = $region48
        $region47: #{tpu_custom_call.1} parent=43 // pred_region
          %s421 = sand.u32 %s92, 1
          %s422 = scalar_lea.sflag [#allocation4], %s421
          %s423 = sand.u32 %s92, 1
          %s424 = smul.addr %s423, 128
          %s425 = scalar_lea.vmem [#allocation7], %s424
          %426 = dma.done %s422, 2048
        $region48: #{tpu_custom_call.1} parent=43 // pred_fallthru
          _
      $region44: #{tpu_custom_call.1} parent=5 // pred_fallthru
        _
    $region6: #{tpu_custom_call.1} parent=1 // loop_footer
      %s19 = sadd.s32 1, %s15
    $region7: #{tpu_custom_call.1} parent=1 // loop_footer_branch
      %14 = sbr.rel target = $region3
    $region8: #{tpu_custom_call.1} parent=1 // loop_exit
      _
    %427 = vsyncpa [#allocation3], 1
    %s428 = scalar_lea.sflag [#allocation3], 1
    %429 = vsyncpa %s428, 1
    %430 = vsyncpa [#allocation6], 1
    %431 = vsyncpa [#allocation4], 1
    %s432 = scalar_lea.sflag [#allocation4], 1
    %433 = vsyncpa %s432, 1

</llo_original>
